<compile_context>
chip_gen: v5e
topology: v5e:2x2
jax: 0.10.0
libtpu: 0.0.40
codegen_flags: <defaults>
</compile_context>

<pallas_src>
import functools

import jax
import jax.numpy as jnp
from jax.experimental import pallas as pl
from jax.experimental.pallas import tpu as pltpu


def _fused_linear_add_relu_kernel(x1_ref, w_ref, x2_ref, o_ref):
    # t1 = x1_aug @ w_aug.T  as a per-lane multiply + lane reduce (VPU + XLU).
    # x1_ref: (M, K+1), w_ref: (1, K+1) -> broadcast multiply, reduce lanes.
    t1 = jnp.sum(x1_ref[...] * w_ref[...], axis=-1, keepdims=True)   # (M, 1)
    # t2 = t1 + x2 ; t3 = relu(t2)  -- (M, 1) broadcasts against (M, C).
    o_ref[...] = jnp.maximum(t1 + x2_ref[...], 0.0).astype(o_ref.dtype)


@functools.partial(jax.jit, donate_argnums=(2,))
def fused_linear_add_relu(x1_aug, w_aug, x2):
    """relu(x1_aug @ w_aug.T + x2), with bias already folded into w_aug.

    x1_aug: (M, K+1) f32   x1 with a trailing ones column
    w_aug:  (1, K+1) f32   [weight | bias] as a lane-major row
    x2:     (M, C)  f32    donated; its buffer is reused for the output
    """
    M, C = x2.shape
    vmem = pl.BlockSpec(memory_space=pltpu.MemorySpace.VMEM)
    return pl.pallas_call(
        _fused_linear_add_relu_kernel,
        out_shape=jax.ShapeDtypeStruct((M, C), jnp.float32),
        in_specs=[vmem, vmem, vmem],
        out_specs=vmem,
        input_output_aliases={2: 0},   # output reuses x2's (donated) buffer
    )(x1_aug, w_aug, x2)


if __name__ == "__main__":
    out_channel = 1
    in_features = 10

    key = jax.random.PRNGKey(0)
    k_x1, k_x2, k_w, k_b = jax.random.split(key, 4)

    # Inputs implied by the module: x1 feeds Linear(10, 1); x2 is (5, 8).
    M = 5
    x1 = jax.random.normal(k_x1, (M, in_features), dtype=jnp.float32)
    x2 = jax.random.normal(k_x2, (M, 8), dtype=jnp.float32)

    # Deterministic parameter init (PyTorch Linear-style uniform bound).
    bound = 1.0 / (in_features ** 0.5)
    w_row = jax.random.uniform(k_w, (1, in_features), dtype=jnp.float32,
                               minval=-bound, maxval=bound)
    b = jax.random.uniform(k_b, (1, out_channel), dtype=jnp.float32,
                           minval=-bound, maxval=bound)

    # Parameter-prep: fold the bias into the weight; append a ones column to x1.
    w_aug = jnp.concatenate([w_row, b], axis=-1)                     # (1, K+1)
    x1_aug = jnp.concatenate(
        [x1, jnp.ones((M, 1), dtype=jnp.float32)], axis=-1)          # (M, K+1)

    # Reference computed (and blocked on) BEFORE the call: x2 is donated below.
    ref = jnp.maximum(x1 @ w_row.T + b + x2, 0.0)
    ref = jax.block_until_ready(ref)

    out = fused_linear_add_relu(x1_aug, w_aug, x2)
    out = jax.block_until_ready(out)
    # NOTE: x2 must not be read after this point (its buffer was donated).

    assert out.shape == (M, 8)
    assert jnp.allclose(out, ref, atol=1e-5, rtol=1e-5)

    print("KERNEL_OK")
</pallas_src>

<mosaic_0001>
module attributes {stable_mosaic.version = 11 : i64} {
  func.func @_fused_linear_add_relu_kernel(%arg0: memref<5x11xf32, #tpu.memory_space<vmem>>, %arg1: memref<1x11xf32, #tpu.memory_space<vmem>>, %arg2: memref<5x8xf32, #tpu.memory_space<vmem>>, %arg3: memref<5x8xf32, #tpu.memory_space<vmem>>) attributes {dimension_semantics = [], scalar_prefetch = 0 : i64, scratch_operands = 0 : i64, tpu.core_type = #tpu.core_type<tc>} {
    %c0 = arith.constant 0 : index
    %c0_0 = arith.constant 0 : index
    %0 = vector.load %arg0[%c0, %c0_0] : memref<5x11xf32, #tpu.memory_space<vmem>>, vector<5x11xf32>
    %c0_1 = arith.constant 0 : index
    %c0_2 = arith.constant 0 : index
    %1 = vector.load %arg1[%c0_1, %c0_2] : memref<1x11xf32, #tpu.memory_space<vmem>>, vector<1x11xf32>
    %2 = vector.broadcast %1 : vector<1x11xf32> to vector<5x11xf32>
    %3 = arith.mulf %0, %2 : vector<5x11xf32>
    %cst = arith.constant dense<0.000000e+00> : vector<5xf32>
    %4 = vector.multi_reduction <add>, %3, %cst [1] : vector<5x11xf32> to vector<5xf32>
    %5 = vector.shape_cast %4 : vector<5xf32> to vector<5x1xf32>
    %c0_3 = arith.constant 0 : index
    %c0_4 = arith.constant 0 : index
    %6 = vector.load %arg2[%c0_3, %c0_4] : memref<5x8xf32, #tpu.memory_space<vmem>>, vector<5x8xf32>
    %7 = vector.broadcast %5 : vector<5x1xf32> to vector<5x8xf32>
    %8 = arith.addf %7, %6 : vector<5x8xf32>
    %cst_5 = arith.constant 0.000000e+00 : f32
    %9 = vector.broadcast %cst_5 : f32 to vector<5x8xf32>
    %10 = arith.maximumf %8, %9 : vector<5x8xf32>
    %c0_6 = arith.constant 0 : index
    %c0_7 = arith.constant 0 : index
    %11 = vector.load %arg3[%c0_6, %c0_7] : memref<5x8xf32, #tpu.memory_space<vmem>>, vector<5x8xf32>
    tpu.vector_store %arg3[%c0_6, %c0_7], %10 {strides = array<i32>} : memref<5x8xf32, #tpu.memory_space<vmem>>, vector<5x8xf32>,
    return
  }
}

</mosaic_0001>

<llo_original>
// kernel: fused_linear_add_relu.1
$region0: #{fused_linear_add_relu.1}
  #allocation0 [shape = 'u32[]', space=smem, size = 0x4, offset = 0x4, fixed_abs, tag = 'smem constant byte address 0x4 - core index']
  #allocation1 [shape = 'u32[72,128]{1,0:T(1,128)}', space=vmem, size = 0x9000, scoped, tag = 'internal scratch']
  %s0 = inlined_call_operand.hbm [shape: f32[5,11], index: 0, kind: input, shape index: {}]
  %s1 = inlined_call_operand.hbm [shape: f32[1,11], index: 1, kind: input, shape index: {}]
  %s2 = inlined_call_operand.hbm [shape: f32[5,8], index: 2, kind: input, shape index: {}, may-alias: {2,3}]
  %s3 = inlined_call_operand.hbm [shape: f32[5,8], index: 3, kind: output, shape index: {}, may-alias: {2,3}]
  %s4 = sld [smem:[#allocation0]]
  $region34: #{fused_linear_add_relu.1} parent=0
    _
  %s6 = ssub.s32 1, %s4
  %s7 = scalar_select 0, %s6, %s4
  $region1: #{fused_linear_add_relu.1} parent=0
    #allocation2 [shape = 'u8[4096]{0}', space=vmem, size = 0x1000, scoped, tag = 'input window, operand 0, single buffered']
    #allocation3 [shape = 's32[1]{0}', space=sflag, size = 0x4, scoped, tag = 'scoped memory for fused_linear_add_relu.1']
    #allocation4 [shape = 's32[1]{0}', space=sflag, size = 0x4, scoped, tag = 'scoped memory for fused_linear_add_relu.1']
    #allocation5 [shape = 'u8[512]{0}', space=vmem, size = 0x400, scoped, tag = 'input window, operand 1, single buffered']
    #allocation6 [shape = 's32[1]{0}', space=sflag, size = 0x4, scoped, tag = 'scoped memory for fused_linear_add_relu.1']
    #allocation7 [shape = 'u8[4096]{0}', space=vmem, size = 0x1000, scoped, tag = 'input window, operand 2, single buffered']
    #allocation8 [shape = 'u8[4096]{0}', space=vmem, size = 0x1000, scoped, tag = 'output window, operand 0, single buffered']
    %8 = vsyncpa [#allocation3], 0
    %9 = vsyncpa [#allocation6], 0
    %10 = vsyncpa [#allocation4], 0
    // Predicated region
    $region2: #{fused_linear_add_relu.1} parent=1 // pred_check
      _
    $region3: #{fused_linear_add_relu.1} parent=1 // pred_check_branch
      %12 = sbr.rel (0) target = $region5
    $region4: #{fused_linear_add_relu.1} parent=1 // pred_region
      %14 = vsyncadd [#allocation3], 0
      %s16 = sshll.u32 %s0, 4
      %s17 = int_to_ptr.hbm [resolvable:$true] %s16
      %s18 = sshll.u32 [#allocation2], 4
      %s19 = int_to_ptr.vmem [resolvable:$true] %s18
      %21 = dma.hbm_to_vmem [thread:$0]  %s17, 128, %s19, [#allocation3]
    $region5: #{fused_linear_add_relu.1} parent=1 // pred_fallthru
      _
    // Predicated region
    $region6: #{fused_linear_add_relu.1} parent=1 // pred_check
      _
    $region7: #{fused_linear_add_relu.1} parent=1 // pred_check_branch
      %23 = sbr.rel (0) target = $region9
    $region8: #{fused_linear_add_relu.1} parent=1 // pred_region
      %25 = vsyncadd [#allocation6], 0
      %s27 = sshll.u32 %s1, 4
      %s28 = int_to_ptr.hbm [resolvable:$true] %s27
      %s29 = sshll.u32 [#allocation5], 4
      %s30 = int_to_ptr.vmem [resolvable:$true] %s29
      %32 = dma.hbm_to_vmem [thread:$0]  %s28, 16, %s30, [#allocation6]
    $region9: #{fused_linear_add_relu.1} parent=1 // pred_fallthru
      _
    // Predicated region
    $region10: #{fused_linear_add_relu.1} parent=1 // pred_check
      _
    $region11: #{fused_linear_add_relu.1} parent=1 // pred_check_branch
      %34 = sbr.rel (0) target = $region13
    $region12: #{fused_linear_add_relu.1} parent=1 // pred_region
      %36 = vsyncadd [#allocation6], 0
      %s38 = sshll.u32 %s2, 4
      %s39 = int_to_ptr.hbm [resolvable:$true] %s38
      %s40 = sshll.u32 [#allocation7], 4
      %s41 = int_to_ptr.vmem [resolvable:$true] %s40
      %43 = dma.hbm_to_vmem [thread:$0]  %s39, 128, %s41, [#allocation6]
    $region13: #{fused_linear_add_relu.1} parent=1 // pred_fallthru
      _
    // Predicated region
    $region14: #{fused_linear_add_relu.1} parent=1 // pred_check
      _
    $region15: #{fused_linear_add_relu.1} parent=1 // pred_check_branch
      %45 = sbr.rel (0) target = $region17
    $region16: #{fused_linear_add_relu.1} parent=1 // pred_region
      %47 = dma.done [#allocation3], 128
    $region17: #{fused_linear_add_relu.1} parent=1 // pred_fallthru
      _
    // Predicated region
    $region18: #{fused_linear_add_relu.1} parent=1 // pred_check
      _
    $region19: #{fused_linear_add_relu.1} parent=1 // pred_check_branch
      %49 = sbr.rel (0) target = $region21
    $region20: #{fused_linear_add_relu.1} parent=1 // pred_region
      %51 = dma.done [#allocation6], 16
    $region21: #{fused_linear_add_relu.1} parent=1 // pred_fallthru
      _
    // Predicated region
    $region22: #{fused_linear_add_relu.1} parent=1 // pred_check
      _
    $region23: #{fused_linear_add_relu.1} parent=1 // pred_check_branch
      %53 = sbr.rel (0) target = $region25
    $region24: #{fused_linear_add_relu.1} parent=1 // pred_region
      %55 = dma.done [#allocation6], 128
    $region25: #{fused_linear_add_relu.1} parent=1 // pred_fallthru
      _
    %v56 = vld [vmem:[#allocation2] sm:$0x1f]
    %v57 = vld [vmem:[#allocation5] sm:$0x1]
    %v59 = vperm.slane %v57, 0
    %v61 = vmul.f32 %v56, %v59
    %vm62 = vcmask 86016
    %v63 = vsel %vm62, %v61, 0.0
    %64 = vadd.xlane.f32.xlu0 %v63
    %v65 = vpop.xlane.xlu0 %64
    %v66 = vld [vmem:[#allocation7] sm:$0x1f]
    %v67 = vadd.f32 %v65, %v66
    %v68 = vmax.f32 %v67, 0.0
    %vm69 = vcmask 61440
    %70 = vst.msk [vmem:[#allocation8] sm:$0x1f] %vm69, %v68
    // Predicated region
    $region26: #{fused_linear_add_relu.1} parent=1 // pred_check
      _
    $region27: #{fused_linear_add_relu.1} parent=1 // pred_check_branch
      %72 = sbr.rel (0) target = $region29
    $region28: #{fused_linear_add_relu.1} parent=1 // pred_region
      %74 = vsyncadd [#allocation4], 0
      %s76 = sshll.u32 [#allocation8], 4
      %s77 = int_to_ptr.vmem [resolvable:$true] %s76
      %s78 = sshll.u32 %s3, 4
      %s79 = int_to_ptr.hbm [resolvable:$true] %s78
      %81 = dma.vmem_to_hbm [thread:$0]  %s77, 128, %s79, [#allocation4]
    $region29: #{fused_linear_add_relu.1} parent=1 // pred_fallthru
      _
    // Predicated region
    $region30: #{fused_linear_add_relu.1} parent=1 // pred_check
      _
    $region31: #{fused_linear_add_relu.1} parent=1 // pred_check_branch
      %83 = sbr.rel (0) target = $region33
    $region32: #{fused_linear_add_relu.1} parent=1 // pred_region
      %85 = dma.done [#allocation4], 128
    $region33: #{fused_linear_add_relu.1} parent=1 // pred_fallthru
      _
    %86 = vsyncpa [#allocation3], 1
    %87 = vsyncpa [#allocation6], 1
    %88 = vsyncpa [#allocation4], 1

</llo_original>
